<compile_context>
chip_gen: v5e
topology: v5e:2x2
jax: 0.10.0
libtpu: 0.0.40
codegen_flags: <defaults>
</compile_context>

<pallas_src>
import functools

import jax
import jax.numpy as jnp
from jax.experimental import pallas as pl
from jax.experimental.pallas import tpu as pltpu

LANE = 128
_VMEM_WORKING_BUDGET = 32 << 20  # double-buffered input bytes we allow per step


def _detect_num_tensorcores():
    """1 on single-TC chips (v5e/v6e/...), 2 on v7x-class chips."""
    try:
        kind = jax.devices()[0].device_kind.lower()
    except Exception:
        return 1
    return 2 if ("v7" in kind or "tpu7" in kind) else 1


def _accumulate(p_ref, t_ref, o_ref, *, block_rows, chunk, masked,
                row0=None, rows_valid=None):
    """Reduce one (block_rows, LANE) block into five (chunk, LANE) moment vregs."""
    g = block_rows // chunk

    def body(gi, carry):
        sp, st, spp, stt, spt = carry
        r = pl.multiple_of(gi * chunk, chunk)
        pv = p_ref[pl.ds(r, chunk), :].astype(jnp.float32)
        tv = t_ref[pl.ds(r, chunk), :].astype(jnp.float32)
        if masked:
            rid = (row0 + gi * chunk
                   + jax.lax.broadcasted_iota(jnp.int32, (chunk, LANE), 0))
            keep = rid < rows_valid
            # NOTE: mask BEFORE any product so OOB garbage never propagates.
            pv = jnp.where(keep, pv, 0.0)
            tv = jnp.where(keep, tv, 0.0)
        return (sp + pv, st + tv, spp + pv * pv, stt + tv * tv, spt + pv * tv)

    zeros = jnp.zeros((chunk, LANE), jnp.float32)
    sp, st, spp, stt, spt = jax.lax.fori_loop(
        0, g, body, (zeros, zeros, zeros, zeros, zeros), unroll=min(4, g))

    o_ref[0, 0] += sp
    o_ref[0, 1] += st
    o_ref[0, 2] += spp
    o_ref[0, 3] += stt
    o_ref[0, 4] += spt


def _pearson_moments_kernel(p_ref, t_ref, o_ref, *,
                            block_rows, chunk, blocks_per_core, rows_valid):
    c = pl.program_id(0)   # core split (size 1 on 1-TC chips)
    j = pl.program_id(1)   # block within core (arbitrary / accumulation axis)

    @pl.when(j == 0)
    def _():
        o_ref[...] = jnp.zeros_like(o_ref)

    # Logical (unclamped) global block id; the DMA index_map clamps to stay
    # in-bounds, and masking below zeroes any duplicated / out-of-range rows.
    b = c * blocks_per_core + j
    row0 = b * block_rows
    full = (row0 + block_rows) <= rows_valid
    partial = jnp.logical_and(row0 < rows_valid, jnp.logical_not(full))
    # Blocks that are entirely past the data (clamped duplicates for a second
    # core) do no work at all.

    @pl.when(full)
    def _():
        _accumulate(p_ref, t_ref, o_ref,
                    block_rows=block_rows, chunk=chunk, masked=False)

    @pl.when(partial)
    def _():
        _accumulate(p_ref, t_ref, o_ref,
                    block_rows=block_rows, chunk=chunk, masked=True,
                    row0=row0, rows_valid=rows_valid)


def pearson_correlation_loss(preds, targets, *, block_rows=4096, num_cores=None):
    p = preds.reshape(-1)
    t = targets.reshape(-1)
    n = p.shape[0]
    nf = jnp.float32(n)

    rows = n // LANE
    rem = n % LANE

    # Sub-128 tail handled in plain JAX (instead of jnp.pad'ing both inputs
    # through HBM).  Only when rem != 0.
    tail_s = None
    if rem:
        tp = jax.lax.slice(p, (rows * LANE,), (n,)).astype(jnp.float32)
        tt = jax.lax.slice(t, (rows * LANE,), (n,)).astype(jnp.float32)
        tail_s = jnp.stack([tp.sum(), tt.sum(), (tp * tp).sum(),
                            (tt * tt).sum(), (tp * tt).sum()])
        # TODO(synk): this aligned-prefix slice still copies ~n elements when
        # rem != 0; a fully copy-free ragged path needs 1-D BlockSpecs with
        # in-kernel lane masking of the final partial vreg.
        p = jax.lax.slice(p, (0,), (rows * LANE,))
        t = jax.lax.slice(t, (0,), (rows * LANE,))

    if rows == 0:
        s = tail_s if tail_s is not None else jnp.zeros((5,), jnp.float32)
    else:
        p2 = p.reshape(rows, LANE)
        t2 = t.reshape(rows, LANE)

        if num_cores is None:
            num_cores = _detect_num_tensorcores()
        num_cores = max(1, int(num_cores))

        # Dtype-dependent sublane chunk: one full packed vreg per load.
        isz_p = jnp.dtype(p2.dtype).itemsize
        isz_t = jnp.dtype(t2.dtype).itemsize
        chunk = {1: 32, 2: 16}.get(min(isz_p, isz_t), 8)

        # Big blocks amortize per-grid-step overhead; cap so the double-buffered
        # working set stays inside the VMEM budget, clamp for small inputs, and
        # keep block_rows a multiple of the chunk height.
        max_rows_vmem = max(chunk, _VMEM_WORKING_BUDGET // (2 * LANE * (isz_p + isz_t)))
        rows_up = ((rows + chunk - 1) // chunk) * chunk
        block_rows = min(int(block_rows), max_rows_vmem, rows_up)
        block_rows = max(chunk, (block_rows // chunk) * chunk)

        total_blocks = pl.cdiv(rows, block_rows)
        blocks_per_core = pl.cdiv(total_blocks, num_cores)
        last_block = total_blocks - 1

        def in_index_map(c, j):
            # Clamp so DMAs never start past the array; duplicated reads for the
            # over-covered tail are fully masked / skipped in-kernel.
            return (jnp.minimum(c * blocks_per_core + j, last_block), 0)

        kernel = functools.partial(
            _pearson_moments_kernel,
            block_rows=block_rows,
            chunk=chunk,
            blocks_per_core=blocks_per_core,
            rows_valid=rows,
        )

        # Core axis: CORE_PARALLEL on multi-TC chips so both TCs stream blocks.
        if num_cores > 1:
            sem0 = getattr(pltpu, "CORE_PARALLEL", pltpu.PARALLEL)
        else:
            sem0 = pltpu.ARBITRARY
        cp_kwargs = {"dimension_semantics": (sem0, pltpu.ARBITRARY)}
        working_bytes = 2 * block_rows * LANE * (isz_p + isz_t)  # double-buffered
        if working_bytes > (12 << 20):
            cp_kwargs["vmem_limit_bytes"] = min(working_bytes + (8 << 20), 48 << 20)

        moments = pl.pallas_call(
            kernel,
            out_shape=jax.ShapeDtypeStruct((num_cores, 5, chunk, LANE), jnp.float32),
            grid_spec=pltpu.PrefetchScalarGridSpec(
                num_scalar_prefetch=0,
                grid=(num_cores, blocks_per_core),
                in_specs=[
                    pl.BlockSpec((block_rows, LANE), in_index_map),
                    pl.BlockSpec((block_rows, LANE), in_index_map),
                ],
                out_specs=pl.BlockSpec((1, 5, chunk, LANE), lambda c, j: (c, 0, 0, 0)),
            ),
            compiler_params=pltpu.CompilerParams(**cp_kwargs),
        )(p2, t2)

        s = jnp.sum(moments, axis=(0, 2, 3))        # (5,) raw moments
        if tail_s is not None:
            s = s + tail_s

    # Tiny finalize in plain JAX (keeps the kernel a pure streaming reduction).
    sp, st, spp, stt, spt = s[0], s[1], s[2], s[3], s[4]
    pm = sp / nf
    tm = st / nf
    cov = spt / nf - pm * tm                        # torch.mean(...) -> /N (biased)
    var_p = (spp - nf * pm * pm) / (nf - 1.0)       # torch.std default -> /(N-1)
    var_t = (stt - nf * tm * tm) / (nf - 1.0)
    pearson = cov / (jnp.sqrt(var_p) * jnp.sqrt(var_t))
    return (1.0 - pearson).astype(jnp.float32)


def _reference(preds, targets):
    p = preds.reshape(-1).astype(jnp.float32)
    t = targets.reshape(-1).astype(jnp.float32)
    pm = jnp.mean(p)
    tm = jnp.mean(t)
    cov = jnp.mean((p - pm) * (t - tm))
    p_std = jnp.std(p, ddof=1)
    t_std = jnp.std(t, ddof=1)
    return 1.0 - cov / (p_std * t_std)


if __name__ == "__main__":
    key = jax.random.PRNGKey(0)
    k1, k2, k3, k4 = jax.random.split(key, 4)

    # Lane-aligned case (zero wrapper-side copies): NCHW (2,4,16,16) = 2048 elems.
    shape = (2, 4, 16, 16)
    preds = jax.random.normal(k1, shape, dtype=jnp.float32)
    noise = jax.random.normal(k2, shape, dtype=jnp.float32)
    targets = 0.5 * preds + 0.5 * noise  # correlated but not identical

    loss = pearson_correlation_loss(preds, targets)
    jax.block_until_ready(loss)
    ref = _reference(preds, targets)
    assert jnp.allclose(loss, ref, atol=1e-5, rtol=1e-5), (loss, ref)

    # Multi-block accumulation path (several grid steps along the j axis).
    loss2 = pearson_correlation_loss(preds, targets, block_rows=8)
    jax.block_until_ready(loss2)
    assert jnp.allclose(loss2, ref, atol=1e-5, rtol=1e-5), (loss2, ref)

    # Masked tail path: 3072 elems = 24 lane-rows, block_rows=16 -> last block partial.
    mshape = (6, 4, 128)
    mp = jax.random.normal(k3, mshape, dtype=jnp.float32)
    mt = 0.3 * mp + 0.7 * jax.random.normal(k4, mshape, dtype=jnp.float32)
    loss3 = pearson_correlation_loss(mp, mt, block_rows=16)
    jax.block_until_ready(loss3)
    ref3 = _reference(mp, mt)
    assert jnp.allclose(loss3, ref3, atol=1e-5, rtol=1e-5), (loss3, ref3)

    # Ragged case: 9*127 = 1143 elements -> 8 full lane rows + 119-element JAX tail.
    rshape = (9, 127)
    rp = jax.random.normal(k3, rshape, dtype=jnp.float32)
    rt = 0.5 * rp + 0.5 * jax.random.normal(k4, rshape, dtype=jnp.float32)
    loss4 = pearson_correlation_loss(rp, rt)
    jax.block_until_ready(loss4)
    ref4 = _reference(rp, rt)
    assert jnp.allclose(loss4, ref4, atol=1e-5, rtol=1e-5), (loss4, ref4)

    print("KERNEL_OK")
</pallas_src>

<mosaic_0001>
module attributes {stable_mosaic.version = 11 : i64} {
  func.func @_pearson_moments_kernel(%arg0: i32, %arg1: i32, %arg2: memref<16x128xf32, #tpu.memory_space<vmem>>, %arg3: memref<16x128xf32, #tpu.memory_space<vmem>>, %arg4: memref<1x5x8x128xf32, #tpu.memory_space<vmem>>) attributes {dimension_semantics = [#tpu.dimension_semantics<arbitrary>, #tpu.dimension_semantics<arbitrary>], iteration_bounds = array<i64: 1, 1>, scalar_prefetch = 0 : i64, scratch_operands = 0 : i64, tpu.core_type = #tpu.core_type<tc>, window_params = [{transform_indices = @transform_0, window_bounds = array<i64: 16, 128>}, {transform_indices = @transform_1, window_bounds = array<i64: 16, 128>}, {transform_indices = @transform_2, window_bounds = array<i64: 1, 5, 8, 128>}]} {
    %c0_i32 = arith.constant 0 : i32
    %0 = arith.cmpi eq, %arg1, %c0_i32 : i32
    %1 = arith.extui %0 : i1 to i32
    %c0_i32_0 = arith.constant 0 : i32
    %2 = arith.cmpi ne, %1, %c0_i32_0 : i32
    scf.if %2 {
      %cst = arith.constant 0.000000e+00 : f32
      %15 = vector.broadcast %cst : f32 to vector<1x5x8x128xf32>
      %c0 = arith.constant 0 : index
      %c0_6 = arith.constant 0 : index
      %c0_7 = arith.constant 0 : index
      %c0_8 = arith.constant 0 : index
      %16 = vector.load %arg4[%c0, %c0_6, %c0_7, %c0_8] : memref<1x5x8x128xf32, #tpu.memory_space<vmem>>, vector<1x5x8x128xf32>
      tpu.vector_store %arg4[%c0, %c0_6, %c0_7, %c0_8], %15 {strides = array<i32>} : memref<1x5x8x128xf32, #tpu.memory_space<vmem>>, vector<1x5x8x128xf32>,
    } else {
    }
    %c1_i32 = arith.constant 1 : i32
    %3 = arith.muli %arg0, %c1_i32 : i32
    %4 = arith.addi %3, %arg1 : i32
    %c16_i32 = arith.constant 16 : i32
    %5 = arith.muli %4, %c16_i32 : i32
    %c16_i32_1 = arith.constant 16 : i32
    %6 = arith.addi %5, %c16_i32_1 : i32
    %c16_i32_2 = arith.constant 16 : i32
    %7 = arith.cmpi sle, %6, %c16_i32_2 : i32
    %c16_i32_3 = arith.constant 16 : i32
    %8 = arith.cmpi slt, %5, %c16_i32_3 : i32
    %true = arith.constant true
    %9 = arith.xori %7, %true : i1
    %10 = arith.andi %8, %9 : i1
    %11 = arith.extui %7 : i1 to i32
    %c0_i32_4 = arith.constant 0 : i32
    %12 = arith.cmpi ne, %11, %c0_i32_4 : i32
    scf.if %12 {
      %cst = arith.constant 0.000000e+00 : f32
      %15 = vector.broadcast %cst : f32 to vector<8x128xf32>
      %c0_i32_6 = arith.constant 0 : i32
      %c8_i32 = arith.constant 8 : i32
      %16 = arith.muli %c0_i32_6, %c8_i32 : i32
      %17 = tpu.assume_multiple %16, 8 : i32
      %18 = arith.index_cast %17 : i32 to index
      %c0 = arith.constant 0 : index
      %19 = vector.load %arg2[%18, %c0] : memref<16x128xf32, #tpu.memory_space<vmem>>, vector<8x128xf32>
      %20 = arith.index_cast %17 : i32 to index
      %c0_7 = arith.constant 0 : index
      %21 = vector.load %arg3[%20, %c0_7] : memref<16x128xf32, #tpu.memory_space<vmem>>, vector<8x128xf32>
      %22 = arith.addf %15, %19 : vector<8x128xf32>
      %23 = arith.addf %15, %21 : vector<8x128xf32>
      %24 = arith.mulf %19, %19 : vector<8x128xf32>
      %25 = arith.addf %15, %24 : vector<8x128xf32>
      %26 = arith.mulf %21, %21 : vector<8x128xf32>
      %27 = arith.addf %15, %26 : vector<8x128xf32>
      %28 = arith.mulf %19, %21 : vector<8x128xf32>
      %29 = arith.addf %15, %28 : vector<8x128xf32>
      %c1_i32_8 = arith.constant 1 : i32
      %c8_i32_9 = arith.constant 8 : i32
      %30 = arith.muli %c1_i32_8, %c8_i32_9 : i32
      %31 = tpu.assume_multiple %30, 8 : i32
      %32 = arith.index_cast %31 : i32 to index
      %c0_10 = arith.constant 0 : index
      %33 = vector.load %arg2[%32, %c0_10] : memref<16x128xf32, #tpu.memory_space<vmem>>, vector<8x128xf32>
      %34 = arith.index_cast %31 : i32 to index
      %c0_11 = arith.constant 0 : index
      %35 = vector.load %arg3[%34, %c0_11] : memref<16x128xf32, #tpu.memory_space<vmem>>, vector<8x128xf32>
      %36 = arith.addf %22, %33 : vector<8x128xf32>
      %37 = arith.addf %23, %35 : vector<8x128xf32>
      %38 = arith.mulf %33, %33 : vector<8x128xf32>
      %39 = arith.addf %25, %38 : vector<8x128xf32>
      %40 = arith.mulf %35, %35 : vector<8x128xf32>
      %41 = arith.addf %27, %40 : vector<8x128xf32>
      %42 = arith.mulf %33, %35 : vector<8x128xf32>
      %43 = arith.addf %29, %42 : vector<8x128xf32>
      %c2_i32 = arith.constant 2 : i32
      %c0_12 = arith.constant 0 : index
      %c0_13 = arith.constant 0 : index
      %c0_14 = arith.constant 0 : index
      %c0_15 = arith.constant 0 : index
      %44 = vector.load %arg4[%c0_12, %c0_13, %c0_14, %c0_15] : memref<1x5x8x128xf32, #tpu.memory_space<vmem>>, vector<1x1x8x128xf32>
      %45 = vector.shape_cast %44 : vector<1x1x8x128xf32> to vector<8x128xf32>
      %46 = arith.addf %45, %36 : vector<8x128xf32>
      %c0_16 = arith.constant 0 : index
      %c0_17 = arith.constant 0 : index
      %c0_18 = arith.constant 0 : index
      %c0_19 = arith.constant 0 : index
      %47 = vector.load %arg4[%c0_16, %c0_17, %c0_18, %c0_19] : memref<1x5x8x128xf32, #tpu.memory_space<vmem>>, vector<1x1x8x128xf32>
      %48 = vector.shape_cast %47 : vector<1x1x8x128xf32> to vector<8x128xf32>
      %49 = vector.shape_cast %46 : vector<8x128xf32> to vector<1x1x8x128xf32>
      tpu.vector_store %arg4[%c0_16, %c0_17, %c0_18, %c0_19], %49 {strides = array<i32>} : memref<1x5x8x128xf32, #tpu.memory_space<vmem>>, vector<1x1x8x128xf32>,
      %c0_20 = arith.constant 0 : index
      %c1 = arith.constant 1 : index
      %c0_21 = arith.constant 0 : index
      %c0_22 = arith.constant 0 : index
      %50 = vector.load %arg4[%c0_20, %c1, %c0_21, %c0_22] : memref<1x5x8x128xf32, #tpu.memory_space<vmem>>, vector<1x1x8x128xf32>
      %51 = vector.shape_cast %50 : vector<1x1x8x128xf32> to vector<8x128xf32>
      %52 = arith.addf %51, %37 : vector<8x128xf32>
      %c0_23 = arith.constant 0 : index
      %c1_24 = arith.constant 1 : index
      %c0_25 = arith.constant 0 : index
      %c0_26 = arith.constant 0 : index
      %53 = vector.load %arg4[%c0_23, %c1_24, %c0_25, %c0_26] : memref<1x5x8x128xf32, #tpu.memory_space<vmem>>, vector<1x1x8x128xf32>
      %54 = vector.shape_cast %53 : vector<1x1x8x128xf32> to vector<8x128xf32>
      %55 = vector.shape_cast %52 : vector<8x128xf32> to vector<1x1x8x128xf32>
      tpu.vector_store %arg4[%c0_23, %c1_24, %c0_25, %c0_26], %55 {strides = array<i32>} : memref<1x5x8x128xf32, #tpu.memory_space<vmem>>, vector<1x1x8x128xf32>,
      %c0_27 = arith.constant 0 : index
      %c2 = arith.constant 2 : index
      %c0_28 = arith.constant 0 : index
      %c0_29 = arith.constant 0 : index
      %56 = vector.load %arg4[%c0_27, %c2, %c0_28, %c0_29] : memref<1x5x8x128xf32, #tpu.memory_space<vmem>>, vector<1x1x8x128xf32>
      %57 = vector.shape_cast %56 : vector<1x1x8x128xf32> to vector<8x128xf32>
      %58 = arith.addf %57, %39 : vector<8x128xf32>
      %c0_30 = arith.constant 0 : index
      %c2_31 = arith.constant 2 : index
      %c0_32 = arith.constant 0 : index
      %c0_33 = arith.constant 0 : index
      %59 = vector.load %arg4[%c0_30, %c2_31, %c0_32, %c0_33] : memref<1x5x8x128xf32, #tpu.memory_space<vmem>>, vector<1x1x8x128xf32>
      %60 = vector.shape_cast %59 : vector<1x1x8x128xf32> to vector<8x128xf32>
      %61 = vector.shape_cast %58 : vector<8x128xf32> to vector<1x1x8x128xf32>
      tpu.vector_store %arg4[%c0_30, %c2_31, %c0_32, %c0_33], %61 {strides = array<i32>} : memref<1x5x8x128xf32, #tpu.memory_space<vmem>>, vector<1x1x8x128xf32>,
      %c0_34 = arith.constant 0 : index
      %c3 = arith.constant 3 : index
      %c0_35 = arith.constant 0 : index
      %c0_36 = arith.constant 0 : index
      %62 = vector.load %arg4[%c0_34, %c3, %c0_35, %c0_36] : memref<1x5x8x128xf32, #tpu.memory_space<vmem>>, vector<1x1x8x128xf32>
      %63 = vector.shape_cast %62 : vector<1x1x8x128xf32> to vector<8x128xf32>
      %64 = arith.addf %63, %41 : vector<8x128xf32>
      %c0_37 = arith.constant 0 : index
      %c3_38 = arith.constant 3 : index
      %c0_39 = arith.constant 0 : index
      %c0_40 = arith.constant 0 : index
      %65 = vector.load %arg4[%c0_37, %c3_38, %c0_39, %c0_40] : memref<1x5x8x128xf32, #tpu.memory_space<vmem>>, vector<1x1x8x128xf32>
      %66 = vector.shape_cast %65 : vector<1x1x8x128xf32> to vector<8x128xf32>
      %67 = vector.shape_cast %64 : vector<8x128xf32> to vector<1x1x8x128xf32>
      tpu.vector_store %arg4[%c0_37, %c3_38, %c0_39, %c0_40], %67 {strides = array<i32>} : memref<1x5x8x128xf32, #tpu.memory_space<vmem>>, vector<1x1x8x128xf32>,
      %c0_41 = arith.constant 0 : index
      %c4 = arith.constant 4 : index
      %c0_42 = arith.constant 0 : index
      %c0_43 = arith.constant 0 : index
      %68 = vector.load %arg4[%c0_41, %c4, %c0_42, %c0_43] : memref<1x5x8x128xf32, #tpu.memory_space<vmem>>, vector<1x1x8x128xf32>
      %69 = vector.shape_cast %68 : vector<1x1x8x128xf32> to vector<8x128xf32>
      %70 = arith.addf %69, %43 : vector<8x128xf32>
      %c0_44 = arith.constant 0 : index
      %c4_45 = arith.constant 4 : index
      %c0_46 = arith.constant 0 : index
      %c0_47 = arith.constant 0 : index
      %71 = vector.load %arg4[%c0_44, %c4_45, %c0_46, %c0_47] : memref<1x5x8x128xf32, #tpu.memory_space<vmem>>, vector<1x1x8x128xf32>
      %72 = vector.shape_cast %71 : vector<1x1x8x128xf32> to vector<8x128xf32>
      %73 = vector.shape_cast %70 : vector<8x128xf32> to vector<1x1x8x128xf32>
      tpu.vector_store %arg4[%c0_44, %c4_45, %c0_46, %c0_47], %73 {strides = array<i32>} : memref<1x5x8x128xf32, #tpu.memory_space<vmem>>, vector<1x1x8x128xf32>,
    } else {
    }
    %13 = arith.extui %10 : i1 to i32
    %c0_i32_5 = arith.constant 0 : i32
    %14 = arith.cmpi ne, %13, %c0_i32_5 : i32
    scf.if %14 {
      %cst = arith.constant 0.000000e+00 : f32
      %15 = vector.broadcast %cst : f32 to vector<8x128xf32>
      %c0_i32_6 = arith.constant 0 : i32
      %c8_i32 = arith.constant 8 : i32
      %16 = arith.muli %c0_i32_6, %c8_i32 : i32
      %17 = tpu.assume_multiple %16, 8 : i32
      %18 = arith.index_cast %17 : i32 to index
      %c0 = arith.constant 0 : index
      %19 = vector.load %arg2[%18, %c0] : memref<16x128xf32, #tpu.memory_space<vmem>>, vector<8x128xf32>
      %20 = arith.index_cast %17 : i32 to index
      %c0_7 = arith.constant 0 : index
      %21 = vector.load %arg3[%20, %c0_7] : memref<16x128xf32, #tpu.memory_space<vmem>>, vector<8x128xf32>
      %c8_i32_8 = arith.constant 8 : i32
      %22 = arith.muli %c0_i32_6, %c8_i32_8 : i32
      %23 = arith.addi %5, %22 : i32
      %24 = tpu.iota {dimensions = array<i32: 0>} : vector<8x128xi32>
      %25 = vector.broadcast %23 : i32 to vector<8x128xi32>
      %26 = arith.addi %25, %24 : vector<8x128xi32>
      %c16_i32_9 = arith.constant 16 : i32
      %27 = vector.broadcast %c16_i32_9 : i32 to vector<8x128xi32>
      %28 = arith.cmpi slt, %26, %27 : vector<8x128xi32>
      %cst_10 = arith.constant 0.000000e+00 : f32
      %29 = vector.broadcast %cst_10 : f32 to vector<8x128xf32>
      %30 = arith.select %28, %19, %29 : vector<8x128xi1>, vector<8x128xf32>
      %cst_11 = arith.constant 0.000000e+00 : f32
      %31 = vector.broadcast %cst_11 : f32 to vector<8x128xf32>
      %32 = arith.select %28, %21, %31 : vector<8x128xi1>, vector<8x128xf32>
      %33 = arith.addf %15, %30 : vector<8x128xf32>
      %34 = arith.addf %15, %32 : vector<8x128xf32>
      %35 = arith.mulf %30, %30 : vector<8x128xf32>
      %36 = arith.addf %15, %35 : vector<8x128xf32>
      %37 = arith.mulf %32, %32 : vector<8x128xf32>
      %38 = arith.addf %15, %37 : vector<8x128xf32>
      %39 = arith.mulf %30, %32 : vector<8x128xf32>
      %40 = arith.addf %15, %39 : vector<8x128xf32>
      %c1_i32_12 = arith.constant 1 : i32
      %c8_i32_13 = arith.constant 8 : i32
      %41 = arith.muli %c1_i32_12, %c8_i32_13 : i32
      %42 = tpu.assume_multiple %41, 8 : i32
      %43 = arith.index_cast %42 : i32 to index
      %c0_14 = arith.constant 0 : index
      %44 = vector.load %arg2[%43, %c0_14] : memref<16x128xf32, #tpu.memory_space<vmem>>, vector<8x128xf32>
      %45 = arith.index_cast %42 : i32 to index
      %c0_15 = arith.constant 0 : index
      %46 = vector.load %arg3[%45, %c0_15] : memref<16x128xf32, #tpu.memory_space<vmem>>, vector<8x128xf32>
      %c8_i32_16 = arith.constant 8 : i32
      %47 = arith.muli %c1_i32_12, %c8_i32_16 : i32
      %48 = arith.addi %5, %47 : i32
      %49 = tpu.iota {dimensions = array<i32: 0>} : vector<8x128xi32>
      %50 = vector.broadcast %48 : i32 to vector<8x128xi32>
      %51 = arith.addi %50, %49 : vector<8x128xi32>
      %c16_i32_17 = arith.constant 16 : i32
      %52 = vector.broadcast %c16_i32_17 : i32 to vector<8x128xi32>
      %53 = arith.cmpi slt, %51, %52 : vector<8x128xi32>
      %cst_18 = arith.constant 0.000000e+00 : f32
      %54 = vector.broadcast %cst_18 : f32 to vector<8x128xf32>
      %55 = arith.select %53, %44, %54 : vector<8x128xi1>, vector<8x128xf32>
      %cst_19 = arith.constant 0.000000e+00 : f32
      %56 = vector.broadcast %cst_19 : f32 to vector<8x128xf32>
      %57 = arith.select %53, %46, %56 : vector<8x128xi1>, vector<8x128xf32>
      %58 = arith.addf %33, %55 : vector<8x128xf32>
      %59 = arith.addf %34, %57 : vector<8x128xf32>
      %60 = arith.mulf %55, %55 : vector<8x128xf32>
      %61 = arith.addf %36, %60 : vector<8x128xf32>
      %62 = arith.mulf %57, %57 : vector<8x128xf32>
      %63 = arith.addf %38, %62 : vector<8x128xf32>
      %64 = arith.mulf %55, %57 : vector<8x128xf32>
      %65 = arith.addf %40, %64 : vector<8x128xf32>
      %c2_i32 = arith.constant 2 : i32
      %c0_20 = arith.constant 0 : index
      %c0_21 = arith.constant 0 : index
      %c0_22 = arith.constant 0 : index
      %c0_23 = arith.constant 0 : index
      %66 = vector.load %arg4[%c0_20, %c0_21, %c0_22, %c0_23] : memref<1x5x8x128xf32, #tpu.memory_space<vmem>>, vector<1x1x8x128xf32>
      %67 = vector.shape_cast %66 : vector<1x1x8x128xf32> to vector<8x128xf32>
      %68 = arith.addf %67, %58 : vector<8x128xf32>
      %c0_24 = arith.constant 0 : index
      %c0_25 = arith.constant 0 : index
      %c0_26 = arith.constant 0 : index
      %c0_27 = arith.constant 0 : index
      %69 = vector.load %arg4[%c0_24, %c0_25, %c0_26, %c0_27] : memref<1x5x8x128xf32, #tpu.memory_space<vmem>>, vector<1x1x8x128xf32>
      %70 = vector.shape_cast %69 : vector<1x1x8x128xf32> to vector<8x128xf32>
      %71 = vector.shape_cast %68 : vector<8x128xf32> to vector<1x1x8x128xf32>
      tpu.vector_store %arg4[%c0_24, %c0_25, %c0_26, %c0_27], %71 {strides = array<i32>} : memref<1x5x8x128xf32, #tpu.memory_space<vmem>>, vector<1x1x8x128xf32>,
      %c0_28 = arith.constant 0 : index
      %c1 = arith.constant 1 : index
      %c0_29 = arith.constant 0 : index
      %c0_30 = arith.constant 0 : index
      %72 = vector.load %arg4[%c0_28, %c1, %c0_29, %c0_30] : memref<1x5x8x128xf32, #tpu.memory_space<vmem>>, vector<1x1x8x128xf32>
      %73 = vector.shape_cast %72 : vector<1x1x8x128xf32> to vector<8x128xf32>
      %74 = arith.addf %73, %59 : vector<8x128xf32>
      %c0_31 = arith.constant 0 : index
      %c1_32 = arith.constant 1 : index
      %c0_33 = arith.constant 0 : index
      %c0_34 = arith.constant 0 : index
      %75 = vector.load %arg4[%c0_31, %c1_32, %c0_33, %c0_34] : memref<1x5x8x128xf32, #tpu.memory_space<vmem>>, vector<1x1x8x128xf32>
      %76 = vector.shape_cast %75 : vector<1x1x8x128xf32> to vector<8x128xf32>
      %77 = vector.shape_cast %74 : vector<8x128xf32> to vector<1x1x8x128xf32>
      tpu.vector_store %arg4[%c0_31, %c1_32, %c0_33, %c0_34], %77 {strides = array<i32>} : memref<1x5x8x128xf32, #tpu.memory_space<vmem>>, vector<1x1x8x128xf32>,
      %c0_35 = arith.constant 0 : index
      %c2 = arith.constant 2 : index
      %c0_36 = arith.constant 0 : index
      %c0_37 = arith.constant 0 : index
      %78 = vector.load %arg4[%c0_35, %c2, %c0_36, %c0_37] : memref<1x5x8x128xf32, #tpu.memory_space<vmem>>, vector<1x1x8x128xf32>
      %79 = vector.shape_cast %78 : vector<1x1x8x128xf32> to vector<8x128xf32>
      %80 = arith.addf %79, %61 : vector<8x128xf32>
      %c0_38 = arith.constant 0 : index
      %c2_39 = arith.constant 2 : index
      %c0_40 = arith.constant 0 : index
      %c0_41 = arith.constant 0 : index
      %81 = vector.load %arg4[%c0_38, %c2_39, %c0_40, %c0_41] : memref<1x5x8x128xf32, #tpu.memory_space<vmem>>, vector<1x1x8x128xf32>
      %82 = vector.shape_cast %81 : vector<1x1x8x128xf32> to vector<8x128xf32>
      %83 = vector.shape_cast %80 : vector<8x128xf32> to vector<1x1x8x128xf32>
      tpu.vector_store %arg4[%c0_38, %c2_39, %c0_40, %c0_41], %83 {strides = array<i32>} : memref<1x5x8x128xf32, #tpu.memory_space<vmem>>, vector<1x1x8x128xf32>,
      %c0_42 = arith.constant 0 : index
      %c3 = arith.constant 3 : index
      %c0_43 = arith.constant 0 : index
      %c0_44 = arith.constant 0 : index
      %84 = vector.load %arg4[%c0_42, %c3, %c0_43, %c0_44] : memref<1x5x8x128xf32, #tpu.memory_space<vmem>>, vector<1x1x8x128xf32>
      %85 = vector.shape_cast %84 : vector<1x1x8x128xf32> to vector<8x128xf32>
      %86 = arith.addf %85, %63 : vector<8x128xf32>
      %c0_45 = arith.constant 0 : index
      %c3_46 = arith.constant 3 : index
      %c0_47 = arith.constant 0 : index
      %c0_48 = arith.constant 0 : index
      %87 = vector.load %arg4[%c0_45, %c3_46, %c0_47, %c0_48] : memref<1x5x8x128xf32, #tpu.memory_space<vmem>>, vector<1x1x8x128xf32>
      %88 = vector.shape_cast %87 : vector<1x1x8x128xf32> to vector<8x128xf32>
      %89 = vector.shape_cast %86 : vector<8x128xf32> to vector<1x1x8x128xf32>
      tpu.vector_store %arg4[%c0_45, %c3_46, %c0_47, %c0_48], %89 {strides = array<i32>} : memref<1x5x8x128xf32, #tpu.memory_space<vmem>>, vector<1x1x8x128xf32>,
      %c0_49 = arith.constant 0 : index
      %c4 = arith.constant 4 : index
      %c0_50 = arith.constant 0 : index
      %c0_51 = arith.constant 0 : index
      %90 = vector.load %arg4[%c0_49, %c4, %c0_50, %c0_51] : memref<1x5x8x128xf32, #tpu.memory_space<vmem>>, vector<1x1x8x128xf32>
      %91 = vector.shape_cast %90 : vector<1x1x8x128xf32> to vector<8x128xf32>
      %92 = arith.addf %91, %65 : vector<8x128xf32>
      %c0_52 = arith.constant 0 : index
      %c4_53 = arith.constant 4 : index
      %c0_54 = arith.constant 0 : index
      %c0_55 = arith.constant 0 : index
      %93 = vector.load %arg4[%c0_52, %c4_53, %c0_54, %c0_55] : memref<1x5x8x128xf32, #tpu.memory_space<vmem>>, vector<1x1x8x128xf32>
      %94 = vector.shape_cast %93 : vector<1x1x8x128xf32> to vector<8x128xf32>
      %95 = vector.shape_cast %92 : vector<8x128xf32> to vector<1x1x8x128xf32>
      tpu.vector_store %arg4[%c0_52, %c4_53, %c0_54, %c0_55], %95 {strides = array<i32>} : memref<1x5x8x128xf32, #tpu.memory_space<vmem>>, vector<1x1x8x128xf32>,
    } else {
    }
    return
  }
  func.func @transform_0(%arg0: i32, %arg1: i32) -> (i32, i32) {
    %c1_i32 = arith.constant 1 : i32
    %0 = arith.muli %arg0, %c1_i32 : i32
    %1 = arith.addi %0, %arg1 : i32
    %c0_i32 = arith.constant 0 : i32
    %2 = arith.minsi %1, %c0_i32 : i32
    %c0_i32_0 = arith.constant 0 : i32
    %c0_i32_1 = arith.constant 0 : i32
    return %2, %c0_i32_0 : i32, i32
  }
  func.func @transform_1(%arg0: i32, %arg1: i32) -> (i32, i32) {
    %c1_i32 = arith.constant 1 : i32
    %0 = arith.muli %arg0, %c1_i32 : i32
    %1 = arith.addi %0, %arg1 : i32
    %c0_i32 = arith.constant 0 : i32
    %2 = arith.minsi %1, %c0_i32 : i32
    %c0_i32_0 = arith.constant 0 : i32
    %c0_i32_1 = arith.constant 0 : i32
    return %2, %c0_i32_0 : i32, i32
  }
  func.func @transform_2(%arg0: i32, %arg1: i32) -> (i32, i32, i32, i32) {
    %c0_i32 = arith.constant 0 : i32
    %c0_i32_0 = arith.constant 0 : i32
    %c0_i32_1 = arith.constant 0 : i32
    %c0_i32_2 = arith.constant 0 : i32
    return %arg0, %c0_i32, %c0_i32_0, %c0_i32_1 : i32, i32, i32, i32
  }
}

</mosaic_0001>

<llo_original>
// kernel: tpu_custom_call.1
$region0: #{tpu_custom_call.1}
  #allocation0 [shape = 'u32[]', space=smem, size = 0x4, offset = 0x4, fixed_abs, tag = 'smem constant byte address 0x4 - core index']
  #allocation1 [shape = 'u32[72,128]{1,0:T(1,128)}', space=vmem, size = 0x9000, scoped, tag = 'internal scratch']
  %s0 = inlined_call_operand.hbm [shape: f32[16,128], index: 0, kind: input, shape index: {}]
  %s1 = inlined_call_operand.hbm [shape: f32[16,128], index: 1, kind: input, shape index: {}]
  %s2 = inlined_call_operand.hbm [shape: f32[1,5,8,128], index: 2, kind: output, shape index: {}]
  %s3 = sld [smem:[#allocation0]]
  $region38: #{tpu_custom_call.1} parent=0
    _
  %s5 = ssub.s32 1, %s3
  %s6 = scalar_select 0, %s5, %s3
  $region1: #{tpu_custom_call.1} parent=0
    #allocation2 [shape = 'u8[8192]{0}', space=vmem, size = 0x2000, scoped, tag = 'input window, operand 0, single buffered']
    #allocation3 [shape = 's32[1]{0}', space=sflag, size = 0x4, scoped, tag = 'scoped memory for tpu_custom_call.1']
    #allocation4 [shape = 's32[1]{0}', space=sflag, size = 0x4, scoped, tag = 'scoped memory for tpu_custom_call.1']
    #allocation5 [shape = 'u8[8192]{0}', space=vmem, size = 0x2000, scoped, tag = 'input window, operand 1, single buffered']
    #allocation6 [shape = 's32[1]{0}', space=sflag, size = 0x4, scoped, tag = 'scoped memory for tpu_custom_call.1']
    #allocation7 [shape = 'u8[20480]{0}', space=vmem, size = 0x5000, scoped, tag = 'output window, operand 0, single buffered']
    %7 = vsyncpa [#allocation3], 0
    %8 = vsyncpa [#allocation6], 0
    %9 = vsyncpa [#allocation4], 0
    // Predicated region
    $region2: #{tpu_custom_call.1} parent=1 // pred_check
      _
    $region3: #{tpu_custom_call.1} parent=1 // pred_check_branch
      %11 = sbr.rel (0) target = $region5
    $region4: #{tpu_custom_call.1} parent=1 // pred_region
      %s12 = sadd.s32 0, 0
      %p13 = scmp.lt.s32.totalorder %s12, 0
      %s14 = scalar_select %p13, %s12, 0
      %s15 = smul.u32 2, %s14
      %17 = vsyncadd [#allocation3], 0
      %s18 = smul.addr %s15, 8
      %s19 = scalar_lea.hbm %s0, %s18
      %s20 = sshll.u32 %s19, 4
      %s21 = int_to_ptr.hbm [resolvable:$true] %s20
      %s22 = sshll.u32 [#allocation2], 4
      %s23 = int_to_ptr.vmem [resolvable:$true] %s22
      %28 = dma.hbm_to_vmem [thread:$0]  %s21, 256, %s23, [#allocation3], 128, 128, 8
    $region5: #{tpu_custom_call.1} parent=1 // pred_fallthru
      _
    // Predicated region
    $region6: #{tpu_custom_call.1} parent=1 // pred_check
      _
    $region7: #{tpu_custom_call.1} parent=1 // pred_check_branch
      %30 = sbr.rel (0) target = $region9
    $region8: #{tpu_custom_call.1} parent=1 // pred_region
      %s31 = sadd.s32 0, 0
      %p32 = scmp.lt.s32.totalorder %s31, 0
      %s33 = scalar_select %p32, %s31, 0
      %s34 = smul.u32 2, %s33
      %36 = vsyncadd [#allocation6], 0
      %s37 = smul.addr %s34, 8
      %s38 = scalar_lea.hbm %s1, %s37
      %s39 = sshll.u32 %s38, 4
      %s40 = int_to_ptr.hbm [resolvable:$true] %s39
      %s41 = sshll.u32 [#allocation5], 4
      %s42 = int_to_ptr.vmem [resolvable:$true] %s41
      %47 = dma.hbm_to_vmem [thread:$0]  %s40, 256, %s42, [#allocation6], 128, 128, 8
    $region9: #{tpu_custom_call.1} parent=1 // pred_fallthru
      _
    // Predicated region
    $region10: #{tpu_custom_call.1} parent=1 // pred_check
      _
    $region11: #{tpu_custom_call.1} parent=1 // pred_check_branch
      %49 = sbr.rel (0) target = $region13
    $region12: #{tpu_custom_call.1} parent=1 // pred_region
      %51 = dma.done [#allocation3], 256
    $region13: #{tpu_custom_call.1} parent=1 // pred_fallthru
      _
    // Predicated region
    $region14: #{tpu_custom_call.1} parent=1 // pred_check
      _
    $region15: #{tpu_custom_call.1} parent=1 // pred_check_branch
      %53 = sbr.rel (0) target = $region17
    $region16: #{tpu_custom_call.1} parent=1 // pred_region
      %55 = dma.done [#allocation6], 256
    $region17: #{tpu_custom_call.1} parent=1 // pred_fallthru
      _
    %s56 = sadd.s32 0, 0
    %p57 = scmp.lt.s32.totalorder %s56, 0
    %s58 = scalar_select %p57, %s56, 0
    %s59 = smul.u32 2, %s58
    %s60 = sadd.s32 0, 0
    %p61 = scmp.lt.s32.totalorder %s60, 0
    %s62 = scalar_select %p61, %s60, 0
    %s63 = smul.u32 2, %s62
    %p64 = scmp.eq.s32.totalorder 0, 0
    // Predicated region
    $region18: #{tpu_custom_call.1} parent=1 // pred_check
      %p65 = pneg %p64
    $region19: #{tpu_custom_call.1} parent=1 // pred_check_branch
      %67 = sbr.rel (%p65) target = $region21
    $region20: #{tpu_custom_call.1} parent=1 // pred_region
      %68 = vst [vmem:[#allocation7] sm:$0xff] 0.0
      %69 = vst [vmem:[#allocation7 + $0x8] sm:$0xff] 0.0
      %70 = vst [vmem:[#allocation7 + $0x10] sm:$0xff] 0.0
      %71 = vst [vmem:[#allocation7 + $0x18] sm:$0xff] 0.0
      %72 = vst [vmem:[#allocation7 + $0x20] sm:$0xff] 0.0
    $region21: #{tpu_custom_call.1} parent=1 // pred_fallthru
      _
    %s73 = sadd.s32 0, 0
    %s74 = smul.u32 %s73, 16
    %s75 = sadd.s32 %s74, 16
    %p76 = scmp.le.s32.totalorder %s75, 16
    %p77 = scmp.lt.s32.totalorder %s74, 16
    %p78 = scmp.gt.s32.totalorder %s75, 16
    %p79 = pnand %p77, %p78
    %p80 = pneg %p79
    // Predicated region
    $region22: #{tpu_custom_call.1} parent=1 // pred_check
      %p81 = pneg %p76
    $region23: #{tpu_custom_call.1} parent=1 // pred_check_branch
      %83 = sbr.rel (%p81) target = $region25
    $region24: #{tpu_custom_call.1} parent=1 // pred_region
      %v84 = vld [vmem:[#allocation2] sm:$0xff]
      %v85 = vld [vmem:[#allocation5] sm:$0xff]
      %v86 = vadd.f32 %v84, 0.0
      %v87 = vadd.f32 %v85, 0.0
      %v88 = vmul.f32 %v84, %v84
      %v89 = vadd.f32 %v88, 0.0
      %v90 = vmul.f32 %v85, %v85
      %v91 = vadd.f32 %v90, 0.0
      %v92 = vmul.f32 %v84, %v85
      %v93 = vadd.f32 %v92, 0.0
      %s94 = scalar_lea.vmem [#allocation2], 8
      %v95 = vld [vmem:[%s94] sm:$0xff]
      %s96 = scalar_lea.vmem [#allocation5], 8
      %v97 = vld [vmem:[%s96] sm:$0xff]
      %v98 = vadd.f32 %v86, %v95
      %v99 = vadd.f32 %v87, %v97
      %v100 = vmul.f32 %v95, %v95
      %v101 = vadd.f32 %v89, %v100
      %v102 = vmul.f32 %v97, %v97
      %v103 = vadd.f32 %v91, %v102
      %v104 = vmul.f32 %v95, %v97
      %v105 = vadd.f32 %v93, %v104
      %v106 = vld [vmem:[#allocation7] sm:$0xff]
      %v107 = vadd.f32 %v106, %v98
      %108 = vst [vmem:[#allocation7] sm:$0xff] %v107
      %s109 = scalar_lea.vmem [#allocation7], 8
      %v110 = vld [vmem:[%s109] sm:$0xff]
      %v111 = vadd.f32 %v110, %v99
      %112 = vst [vmem:[%s109] sm:$0xff] %v111
      %s113 = scalar_lea.vmem [#allocation7], 16
      %v114 = vld [vmem:[%s113] sm:$0xff]
      %v115 = vadd.f32 %v114, %v101
      %116 = vst [vmem:[%s113] sm:$0xff] %v115
      %s117 = scalar_lea.vmem [#allocation7], 24
      %v118 = vld [vmem:[%s117] sm:$0xff]
      %v119 = vadd.f32 %v118, %v103
      %120 = vst [vmem:[%s117] sm:$0xff] %v119
      %s121 = scalar_lea.vmem [#allocation7], 32
      %v122 = vld [vmem:[%s121] sm:$0xff]
      %v123 = vadd.f32 %v122, %v105
      %124 = vst [vmem:[%s121] sm:$0xff] %v123
    $region25: #{tpu_custom_call.1} parent=1 // pred_fallthru
      _
    // Predicated region
    $region26: #{tpu_custom_call.1} parent=1 // pred_check
      _
    $region27: #{tpu_custom_call.1} parent=1 // pred_check_branch
      %126 = sbr.rel (%p79) target = $region29
    $region28: #{tpu_custom_call.1} parent=1 // pred_region
      %v127 = vld [vmem:[#allocation2] sm:$0xff]
      %v128 = vld [vmem:[#allocation5] sm:$0xff]
      %v129 = vlaneseq
      %v130 = vshrl.u32 %v129, 7
      %v131 = vstv %s74
      %v132 = vadd.s32 %v131, %v130
      %vm133 = vcmp.lt.s32.totalorder %v132, 16
      %v134 = vsel %vm133, %v127, 0.0
      %v135 = vsel %vm133, %v128, 0.0
      %v136 = vadd.f32 %v134, 0.0
      %v137 = vadd.f32 %v135, 0.0
      %v138 = vmul.f32 %v134, %v134
      %v139 = vadd.f32 %v138, 0.0
      %v140 = vmul.f32 %v135, %v135
      %v141 = vadd.f32 %v140, 0.0
      %v142 = vmul.f32 %v134, %v135
      %v143 = vadd.f32 %v142, 0.0
      %s144 = scalar_lea.vmem [#allocation2], 8
      %v145 = vld [vmem:[%s144] sm:$0xff]
      %s146 = scalar_lea.vmem [#allocation5], 8
      %v147 = vld [vmem:[%s146] sm:$0xff]
      %s148 = sadd.s32 %s74, 8
      %v149 = vstv %s148
      %v150 = vadd.s32 %v149, %v130
      %vm151 = vcmp.lt.s32.totalorder %v150, 16
      %v152 = vsel %vm151, %v145, 0.0
      %v153 = vsel %vm151, %v147, 0.0
      %v154 = vadd.f32 %v136, %v152
      %v155 = vadd.f32 %v137, %v153
      %v156 = vmul.f32 %v152, %v152
      %v157 = vadd.f32 %v139, %v156
      %v158 = vmul.f32 %v153, %v153
      %v159 = vadd.f32 %v141, %v158
      %v160 = vmul.f32 %v152, %v153
      %v161 = vadd.f32 %v143, %v160
      %v162 = vld [vmem:[#allocation7] sm:$0xff]
      %v163 = vadd.f32 %v162, %v154
      %164 = vst [vmem:[#allocation7] sm:$0xff] %v163
      %s165 = scalar_lea.vmem [#allocation7], 8
      %v166 = vld [vmem:[%s165] sm:$0xff]
      %v167 = vadd.f32 %v166, %v155
      %168 = vst [vmem:[%s165] sm:$0xff] %v167
      %s169 = scalar_lea.vmem [#allocation7], 16
      %v170 = vld [vmem:[%s169] sm:$0xff]
      %v171 = vadd.f32 %v170, %v157
      %172 = vst [vmem:[%s169] sm:$0xff] %v171
      %s173 = scalar_lea.vmem [#allocation7], 24
      %v174 = vld [vmem:[%s173] sm:$0xff]
      %v175 = vadd.f32 %v174, %v159
      %176 = vst [vmem:[%s173] sm:$0xff] %v175
      %s177 = scalar_lea.vmem [#allocation7], 32
      %v178 = vld [vmem:[%s177] sm:$0xff]
      %v179 = vadd.f32 %v178, %v161
      %180 = vst [vmem:[%s177] sm:$0xff] %v179
    $region29: #{tpu_custom_call.1} parent=1 // pred_fallthru
      _
    // Predicated region
    $region30: #{tpu_custom_call.1} parent=1 // pred_check
      _
    $region31: #{tpu_custom_call.1} parent=1 // pred_check_branch
      %182 = sbr.rel (0) target = $region33
    $region32: #{tpu_custom_call.1} parent=1 // pred_region
      %184 = vsyncadd [#allocation4], 0
      %s185 = sshll.u32 [#allocation7], 4
      %s186 = int_to_ptr.vmem [resolvable:$true] %s185
      %s187 = sshll.u32 %s2, 4
      %s188 = int_to_ptr.hbm [resolvable:$true] %s187
      %193 = dma.vmem_to_hbm [thread:$0]  %s186, 640, %s188, [#allocation4], 128, 128, 8
    $region33: #{tpu_custom_call.1} parent=1 // pred_fallthru
      _
    // Predicated region
    $region34: #{tpu_custom_call.1} parent=1 // pred_check
      _
    $region35: #{tpu_custom_call.1} parent=1 // pred_check_branch
      %195 = sbr.rel (0) target = $region37
    $region36: #{tpu_custom_call.1} parent=1 // pred_region
      %197 = dma.done [#allocation4], 640
    $region37: #{tpu_custom_call.1} parent=1 // pred_fallthru
      _
    %198 = vsyncpa [#allocation3], 1
    %199 = vsyncpa [#allocation6], 1
    %200 = vsyncpa [#allocation4], 1

</llo_original>
